<compile_context>
chip_gen: v6e
topology: v6e:2x2x1
jax: 0.10.0
libtpu: 0.0.40
codegen_flags: <defaults>
</compile_context>

<pallas_src>
import jax
import jax.numpy as jnp
from jax import lax
from jax.experimental import pallas as pl
from jax.experimental.pallas import tpu as pltpu

EPS = 1e-6


def _reduced_l1_kernel(x_ref, y_ref, cls_ref, numer_ref, denom_ref,
                       numer_acc, denom_acc):
    # Grid = (N, P, T); T (spatial) is the reduction axis (last, 'arbitrary').
    # x_ref, y_ref : (1, C, THW)   input / target tile (native dtype)
    # cls_ref      : (1, 1, THW)   int8/int32 class-id tile (sentinel == S in padding)
    # numer_ref    : (1, 1, S, 1)  channel-summed masked-L1 partial for this (n, p)
    # denom_ref    : (1, 1, S, 1)  mask-area partial for this (n, p)
    # numer_acc    : (S, 1) f32    running masked L1 sums
    # denom_acc    : (S, 1) f32    running mask areas
    t = pl.program_id(2)
    n_t = pl.num_programs(2)
    S = numer_ref.shape[2]
    THW = x_ref.shape[2]

    @pl.when(t == 0)
    def _():
        numer_acc[...] = jnp.zeros_like(numer_acc)
        denom_acc[...] = jnp.zeros_like(denom_acc)

    # |x - y| in the native dtype (bf16 VPU on v6e/v7x); accumulate in f32.
    diff = jnp.abs(x_ref[...] - y_ref[...])                       # (1, C, THW)
    l1_csum = jnp.sum(diff.astype(jnp.float32), axis=1)           # (1, THW)

    # Per-class masks rebuilt from the index map; the single compare is reused
    # for both numerator (masked L1) and denominator (mask area).  Padded /
    # out-of-bounds lanes carry the sentinel id and never match any class, so
    # any garbage in the ragged x/y tail is select-discarded.
    cls = cls_ref[0].astype(jnp.int32)                            # (1, THW)
    class_ids = lax.broadcasted_iota(jnp.int32, (S, THW), 0)
    eq = cls == class_ids                                         # (S, THW)

    numer_acc[...] += jnp.sum(jnp.where(eq, l1_csum, 0.0), axis=1, keepdims=True)
    denom_acc[...] += jnp.sum(jnp.where(eq, 1.0, 0.0), axis=1, keepdims=True)

    @pl.when(t == n_t - 1)
    def _():
        numer_ref[...] = numer_acc[...][None, None]               # (1, 1, S, 1)
        denom_ref[...] = denom_acc[...][None, None]


def _round_up(a, m):
    return ((a + m - 1) // m) * m


def _choose_thw(hw, c, itemsize, num_classes, max_tile_lanes=None,
                vmem_tile_budget=28 << 20, raw_step_target=2 << 20):
    """Spatial tile (multiple of 128) from padded-VMEM and per-step-HBM budgets."""
    sub = 32 // itemsize                       # sublane multiple: f32->8, bf16->16, i8->32
    c_pad = _round_up(c, sub)
    # Padded VMEM bytes per spatial lane: x + y double-buffered (C padded to the
    # sublane multiple) + cls row (int8 pads 1->32 sublanes == int32 1->8, both
    # 32 B/lane, x2 buffers) + in-kernel (S, THW) iota/compare/select
    # intermediates (~16 B per class-lane).
    per_lane_vmem = 2 * (2 * c_pad * itemsize + 32) + 16 * num_classes
    lanes_by_vmem = max(128, vmem_tile_budget // per_lane_vmem)
    # Raw HBM bytes per lane (x + y + int8 cls); target ~2 MiB per grid step so
    # the ~0.35 us/step pipeline overhead is well amortized.
    lanes_by_hbm = max(8 * 128, raw_step_target // (2 * c * itemsize + 1))
    thw = min(lanes_by_vmem, lanes_by_hbm, _round_up(hw, 128))
    if max_tile_lanes is not None:
        thw = min(thw, max_tile_lanes)
    return max(128, (thw // 128) * 128)


def reduced_l1_loss(x, y, class_map, num_classes, max_tile_lanes=None):
    """Object-aware, area-normalized reduced L1 loss.

    x, y      : (N, C, H, W)  float (bf16 recommended: halves HBM traffic)
    class_map : (N, H, W)     integer semantic class id per pixel, in [0, num_classes)
    """
    N, C, H, W = x.shape
    S = int(num_classes)
    HW = H * W
    itemsize = jnp.dtype(x.dtype).itemsize

    THW = _choose_thw(HW, C, itemsize, S, max_tile_lanes)
    n_tiles = pl.cdiv(HW, THW)
    P = 2 if n_tiles >= 2 else 1          # spatial 'parallel' split (v7x megacore for small N)
    T = pl.cdiv(n_tiles, P)
    HW_pad = P * T * THW
    last_valid = n_tiles - 1              # x/y block-index clamp; padded tiles re-read the
                                          # last real block and are killed by the sentinel.

    x_f = x.reshape(N, C, HW)
    y_f = y.reshape(N, C, HW)

    # Class map travels as int8 (4x less HBM than int32) when it fits; padded
    # spatial positions get sentinel id == S so they never match any class.
    cls_dtype = jnp.int8 if S < 127 else jnp.int32
    cls_f = class_map.reshape(N, 1, HW).astype(cls_dtype)
    if HW_pad > HW:
        cls_f = jnp.pad(cls_f, ((0, 0), (0, 0), (0, HW_pad - HW)),
                        constant_values=S)

    # Padding-aware VMEM limit, capped below v7x's 64 MiB physical VMEM.
    c_pad = _round_up(C, 32 // itemsize)
    working = THW * (2 * (2 * c_pad * itemsize + 32) + 16 * S)
    vmem_limit = int(min(48 << 20, max(16 << 20, working + (8 << 20))))

    def xy_index(n, p, t):
        return (n, 0, jnp.minimum(p * T + t, last_valid))

    def cls_index(n, p, t):
        return (n, 0, p * T + t)

    numer, denom = pl.pallas_call(
        _reduced_l1_kernel,
        out_shape=(jax.ShapeDtypeStruct((N, P, S, 1), jnp.float32),
                   jax.ShapeDtypeStruct((N, P, S, 1), jnp.float32)),
        grid_spec=pltpu.PrefetchScalarGridSpec(
            num_scalar_prefetch=0,
            grid=(N, P, T),
            in_specs=[
                pl.BlockSpec((1, C, THW), xy_index),
                pl.BlockSpec((1, C, THW), xy_index),
                pl.BlockSpec((1, 1, THW), cls_index),
            ],
            out_specs=[
                pl.BlockSpec((1, 1, S, 1), lambda n, p, t: (n, p, 0, 0)),
                pl.BlockSpec((1, 1, S, 1), lambda n, p, t: (n, p, 0, 0)),
            ],
            scratch_shapes=[
                pltpu.VMEM((S, 1), jnp.float32),   # numer accumulator
                pltpu.VMEM((S, 1), jnp.float32),   # denom accumulator
            ],
        ),
        compiler_params=pltpu.CompilerParams(
            dimension_semantics=("parallel", "parallel", "arbitrary"),
            vmem_limit_bytes=vmem_limit,
        ),
    )(x_f, y_f, cls_f)

    # Cheap wrapper glue: combine spatial-split partials, apply the 1/C channel
    # mean and area normalization, then mean over (batch, class).
    numer_ns = jnp.sum(numer[..., 0], axis=1)        # (N, S)
    denom_ns = jnp.sum(denom[..., 0], axis=1)        # (N, S)
    per_class = (numer_ns / C) / (denom_ns + EPS)
    return jnp.mean(per_class)


def reduced_l1_loss_from_onehot(x, y, semantics):
    """Matches the original module signature: semantics is (N, S, H, W) one-hot.

    # TODO(synk): soft (non-one-hot) semantic maps would need a dense-mask path.
    """
    S = semantics.shape[1]
    class_map = jnp.argmax(semantics, axis=1)
    return reduced_l1_loss(x, y, class_map, S)


def reduced_l1_loss_ref(x, y, semantics):
    l1 = jnp.abs(x.astype(jnp.float32) - y.astype(jnp.float32))
    per_pixel = jnp.mean(l1, axis=1, keepdims=True)             # (N,1,H,W)
    sem = semantics.astype(jnp.float32)
    numer = jnp.sum(sem * per_pixel, axis=(2, 3))               # (N,S)
    denom = jnp.sum(sem, axis=(2, 3))                           # (N,S)
    return jnp.mean(numer / (denom + EPS))


if __name__ == "__main__":
    key = jax.random.PRNGKey(0)
    k1, k2, k3, k4, k5, k6 = jax.random.split(key, 6)

    N, C, H, W = 2, 4, 16, 16
    S = 3  # number of semantic object classes

    x = jax.random.normal(k1, (N, C, H, W), dtype=jnp.float32)
    y = jax.random.normal(k2, (N, C, H, W), dtype=jnp.float32)
    class_map = jax.random.randint(k3, (N, H, W), 0, S, dtype=jnp.int32)
    semantics = jnp.transpose(jax.nn.one_hot(class_map, S, dtype=jnp.float32),
                              (0, 3, 1, 2))                      # (N,S,H,W)

    # f32 path vs dense reference.
    loss = jax.block_until_ready(reduced_l1_loss(x, y, class_map, S))
    ref = reduced_l1_loss_ref(x, y, semantics)
    assert jnp.allclose(loss, ref, atol=1e-5, rtol=1e-4), (loss, ref)

    # Original-module signature (one-hot semantics) convenience path.
    loss_oh = jax.block_until_ready(reduced_l1_loss_from_onehot(x, y, semantics))
    assert jnp.allclose(loss_oh, ref, atol=1e-5, rtol=1e-4), (loss_oh, ref)

    # bf16 passthrough (halved HBM traffic); |x-y| runs in bf16, accumulation in
    # f32 -> compare against reference on the bf16-rounded inputs with a bf16
    # tolerance.
    x_bf, y_bf = x.astype(jnp.bfloat16), y.astype(jnp.bfloat16)
    loss_bf = jax.block_until_ready(reduced_l1_loss(x_bf, y_bf, class_map, S))
    ref_bf = reduced_l1_loss_ref(x_bf.astype(jnp.float32),
                                 y_bf.astype(jnp.float32), semantics)
    assert jnp.allclose(loss_bf, ref_bf, atol=5e-3, rtol=1e-2), (loss_bf, ref_bf)

    # Ragged + sentinel-padding path: HW = 320 with a single (larger) tile.
    H2, W2 = 16, 20
    x2 = jax.random.normal(k4, (N, C, H2, W2), dtype=jnp.float32)
    y2 = jax.random.normal(k5, (N, C, H2, W2), dtype=jnp.float32)
    cm2 = jax.random.randint(k6, (N, H2, W2), 0, S, dtype=jnp.int32)
    sem2 = jnp.transpose(jax.nn.one_hot(cm2, S, dtype=jnp.float32), (0, 3, 1, 2))
    loss2 = jax.block_until_ready(reduced_l1_loss(x2, y2, cm2, S))
    ref2 = reduced_l1_loss_ref(x2, y2, sem2)
    assert jnp.allclose(loss2, ref2, atol=1e-5, rtol=1e-4), (loss2, ref2)

    # Multi-tile + P=2 spatial split + clamped fully-padded tile path
    # (forces THW=128 so HW=320 -> 3 real tiles split across 2 parallel halves).
    loss3 = jax.block_until_ready(
        reduced_l1_loss(x2, y2, cm2, S, max_tile_lanes=128))
    assert jnp.allclose(loss3, ref2, atol=1e-5, rtol=1e-4), (loss3, ref2)

    print("KERNEL_OK")
</pallas_src>

<mosaic_0001>
module attributes {stable_mosaic.version = 11 : i64} {
  func.func @_reduced_l1_kernel(%arg0: i32, %arg1: i32, %arg2: i32, %arg3: memref<1x4x256xf32, #tpu.memory_space<vmem>>, %arg4: memref<1x4x256xf32, #tpu.memory_space<vmem>>, %arg5: memref<1x1x256xi8, #tpu.memory_space<vmem>>, %arg6: memref<1x1x3x1xf32, #tpu.memory_space<vmem>>, %arg7: memref<1x1x3x1xf32, #tpu.memory_space<vmem>>, %arg8: memref<3x1xf32, #tpu.memory_space<vmem>>, %arg9: memref<3x1xf32, #tpu.memory_space<vmem>>) attributes {dimension_semantics = [#tpu.dimension_semantics<parallel>, #tpu.dimension_semantics<parallel>, #tpu.dimension_semantics<arbitrary>], iteration_bounds = array<i64: 2, 1, 1>, scalar_prefetch = 0 : i64, scratch_operands = 2 : i64, tpu.core_type = #tpu.core_type<tc>, window_params = [{transform_indices = @transform_0, window_bounds = array<i64: 1, 4, 256>}, {transform_indices = @transform_1, window_bounds = array<i64: 1, 4, 256>}, {transform_indices = @transform_2, window_bounds = array<i64: 1, 1, 256>}, {transform_indices = @transform_3, window_bounds = array<i64: 1, 1, 3, 1>}, {transform_indices = @transform_4, window_bounds = array<i64: 1, 1, 3, 1>}]} {
    %c0_i32 = arith.constant 0 : i32
    %0 = arith.cmpi eq, %arg2, %c0_i32 : i32
    %1 = arith.extui %0 : i1 to i32
    %c0_i32_0 = arith.constant 0 : i32
    %2 = arith.cmpi ne, %1, %c0_i32_0 : i32
    scf.if %2 {
      %cst_24 = arith.constant 0.000000e+00 : f32
      %34 = vector.broadcast %cst_24 : f32 to vector<3x1xf32>
      %c0_25 = arith.constant 0 : index
      %c0_26 = arith.constant 0 : index
      %35 = vector.load %arg8[%c0_25, %c0_26] : memref<3x1xf32, #tpu.memory_space<vmem>>, vector<3x1xf32>
      tpu.vector_store %arg8[%c0_25, %c0_26], %34 {strides = array<i32>} : memref<3x1xf32, #tpu.memory_space<vmem>>, vector<3x1xf32>,
      %cst_27 = arith.constant 0.000000e+00 : f32
      %36 = vector.broadcast %cst_27 : f32 to vector<3x1xf32>
      %c0_28 = arith.constant 0 : index
      %c0_29 = arith.constant 0 : index
      %37 = vector.load %arg9[%c0_28, %c0_29] : memref<3x1xf32, #tpu.memory_space<vmem>>, vector<3x1xf32>
      tpu.vector_store %arg9[%c0_28, %c0_29], %36 {strides = array<i32>} : memref<3x1xf32, #tpu.memory_space<vmem>>, vector<3x1xf32>,
    } else {
    }
    %c0 = arith.constant 0 : index
    %c0_1 = arith.constant 0 : index
    %c0_2 = arith.constant 0 : index
    %3 = vector.load %arg3[%c0, %c0_1, %c0_2] : memref<1x4x256xf32, #tpu.memory_space<vmem>>, vector<1x4x256xf32>
    %c0_3 = arith.constant 0 : index
    %c0_4 = arith.constant 0 : index
    %c0_5 = arith.constant 0 : index
    %4 = vector.load %arg4[%c0_3, %c0_4, %c0_5] : memref<1x4x256xf32, #tpu.memory_space<vmem>>, vector<1x4x256xf32>
    %5 = arith.subf %3, %4 : vector<1x4x256xf32>
    %6 = math.absf %5 : vector<1x4x256xf32>
    %cst = arith.constant dense<0.000000e+00> : vector<1x256xf32>
    %7 = vector.multi_reduction <add>, %6, %cst [1] : vector<1x4x256xf32> to vector<1x256xf32>
    %c0_6 = arith.constant 0 : index
    %c0_7 = arith.constant 0 : index
    %c0_8 = arith.constant 0 : index
    %8 = vector.load %arg5[%c0_6, %c0_7, %c0_8] : memref<1x1x256xi8, #tpu.memory_space<vmem>>, vector<1x1x256xi8>
    %9 = vector.shape_cast %8 : vector<1x1x256xi8> to vector<1x256xi8>
    %10 = arith.extsi %9 : vector<1x256xi8> to vector<1x256xi32>
    %11 = tpu.iota {dimensions = array<i32: 0>} : vector<3x256xi32>
    %12 = vector.broadcast %10 : vector<1x256xi32> to vector<3x256xi32>
    %13 = arith.cmpi eq, %12, %11 : vector<3x256xi32>
    %c0_9 = arith.constant 0 : index
    %c0_10 = arith.constant 0 : index
    %14 = vector.load %arg8[%c0_9, %c0_10] : memref<3x1xf32, #tpu.memory_space<vmem>>, vector<3x1xf32>
    %cst_11 = arith.constant 0.000000e+00 : f32
    %15 = vector.shape_cast %7 : vector<1x256xf32> to vector<1x256xf32>
    %16 = vector.broadcast %15 : vector<1x256xf32> to vector<3x256xf32>
    %17 = vector.broadcast %cst_11 : f32 to vector<3x256xf32>
    %18 = arith.select %13, %16, %17 : vector<3x256xi1>, vector<3x256xf32>
    %cst_12 = arith.constant dense<0.000000e+00> : vector<3xf32>
    %19 = vector.multi_reduction <add>, %18, %cst_12 [1] : vector<3x256xf32> to vector<3xf32>
    %20 = vector.shape_cast %19 : vector<3xf32> to vector<3x1xf32>
    %21 = arith.addf %14, %20 : vector<3x1xf32>
    %c0_13 = arith.constant 0 : index
    %c0_14 = arith.constant 0 : index
    %22 = vector.load %arg8[%c0_13, %c0_14] : memref<3x1xf32, #tpu.memory_space<vmem>>, vector<3x1xf32>
    tpu.vector_store %arg8[%c0_13, %c0_14], %21 {strides = array<i32>} : memref<3x1xf32, #tpu.memory_space<vmem>>, vector<3x1xf32>,
    %c0_15 = arith.constant 0 : index
    %c0_16 = arith.constant 0 : index
    %23 = vector.load %arg9[%c0_15, %c0_16] : memref<3x1xf32, #tpu.memory_space<vmem>>, vector<3x1xf32>
    %cst_17 = arith.constant 1.000000e+00 : f32
    %cst_18 = arith.constant 0.000000e+00 : f32
    %24 = vector.broadcast %cst_17 : f32 to vector<3x256xf32>
    %25 = vector.broadcast %cst_18 : f32 to vector<3x256xf32>
    %26 = arith.select %13, %24, %25 : vector<3x256xi1>, vector<3x256xf32>
    %cst_19 = arith.constant dense<0.000000e+00> : vector<3xf32>
    %27 = vector.multi_reduction <add>, %26, %cst_19 [1] : vector<3x256xf32> to vector<3xf32>
    %28 = vector.shape_cast %27 : vector<3xf32> to vector<3x1xf32>
    %29 = arith.addf %23, %28 : vector<3x1xf32>
    %c0_20 = arith.constant 0 : index
    %c0_21 = arith.constant 0 : index
    %30 = vector.load %arg9[%c0_20, %c0_21] : memref<3x1xf32, #tpu.memory_space<vmem>>, vector<3x1xf32>
    tpu.vector_store %arg9[%c0_20, %c0_21], %29 {strides = array<i32>} : memref<3x1xf32, #tpu.memory_space<vmem>>, vector<3x1xf32>,
    %c0_i32_22 = arith.constant 0 : i32
    %31 = arith.cmpi eq, %arg2, %c0_i32_22 : i32
    %32 = arith.extui %31 : i1 to i32
    %c0_i32_23 = arith.constant 0 : i32
    %33 = arith.cmpi ne, %32, %c0_i32_23 : i32
    scf.if %33 {
      %c0_24 = arith.constant 0 : index
      %c0_25 = arith.constant 0 : index
      %34 = vector.load %arg8[%c0_24, %c0_25] : memref<3x1xf32, #tpu.memory_space<vmem>>, vector<3x1xf32>
      %35 = vector.shape_cast %34 : vector<3x1xf32> to vector<1x1x3x1xf32>
      %c0_26 = arith.constant 0 : index
      %c0_27 = arith.constant 0 : index
      %c0_28 = arith.constant 0 : index
      %c0_29 = arith.constant 0 : index
      %36 = vector.load %arg6[%c0_26, %c0_27, %c0_28, %c0_29] : memref<1x1x3x1xf32, #tpu.memory_space<vmem>>, vector<1x1x3x1xf32>
      tpu.vector_store %arg6[%c0_26, %c0_27, %c0_28, %c0_29], %35 {strides = array<i32>} : memref<1x1x3x1xf32, #tpu.memory_space<vmem>>, vector<1x1x3x1xf32>,
      %c0_30 = arith.constant 0 : index
      %c0_31 = arith.constant 0 : index
      %37 = vector.load %arg9[%c0_30, %c0_31] : memref<3x1xf32, #tpu.memory_space<vmem>>, vector<3x1xf32>
      %38 = vector.shape_cast %37 : vector<3x1xf32> to vector<1x1x3x1xf32>
      %c0_32 = arith.constant 0 : index
      %c0_33 = arith.constant 0 : index
      %c0_34 = arith.constant 0 : index
      %c0_35 = arith.constant 0 : index
      %39 = vector.load %arg7[%c0_32, %c0_33, %c0_34, %c0_35] : memref<1x1x3x1xf32, #tpu.memory_space<vmem>>, vector<1x1x3x1xf32>
      tpu.vector_store %arg7[%c0_32, %c0_33, %c0_34, %c0_35], %38 {strides = array<i32>} : memref<1x1x3x1xf32, #tpu.memory_space<vmem>>, vector<1x1x3x1xf32>,
    } else {
    }
    return
  }
  func.func @transform_0(%arg0: i32, %arg1: i32, %arg2: i32) -> (i32, i32, i32) {
    %c1_i32 = arith.constant 1 : i32
    %0 = arith.muli %arg1, %c1_i32 : i32
    %1 = arith.addi %0, %arg2 : i32
    %c0_i32 = arith.constant 0 : i32
    %2 = arith.minsi %1, %c0_i32 : i32
    %c0_i32_0 = arith.constant 0 : i32
    %c0_i32_1 = arith.constant 0 : i32
    return %arg0, %c0_i32_0, %2 : i32, i32, i32
  }
  func.func @transform_1(%arg0: i32, %arg1: i32, %arg2: i32) -> (i32, i32, i32) {
    %c1_i32 = arith.constant 1 : i32
    %0 = arith.muli %arg1, %c1_i32 : i32
    %1 = arith.addi %0, %arg2 : i32
    %c0_i32 = arith.constant 0 : i32
    %2 = arith.minsi %1, %c0_i32 : i32
    %c0_i32_0 = arith.constant 0 : i32
    %c0_i32_1 = arith.constant 0 : i32
    return %arg0, %c0_i32_0, %2 : i32, i32, i32
  }
  func.func @transform_2(%arg0: i32, %arg1: i32, %arg2: i32) -> (i32, i32, i32) {
    %c1_i32 = arith.constant 1 : i32
    %0 = arith.muli %arg1, %c1_i32 : i32
    %1 = arith.addi %0, %arg2 : i32
    %c0_i32 = arith.constant 0 : i32
    %c0_i32_0 = arith.constant 0 : i32
    return %arg0, %c0_i32, %1 : i32, i32, i32
  }
  func.func @transform_3(%arg0: i32, %arg1: i32, %arg2: i32) -> (i32, i32, i32, i32) {
    %c0_i32 = arith.constant 0 : i32
    %c0_i32_0 = arith.constant 0 : i32
    %c0_i32_1 = arith.constant 0 : i32
    return %arg0, %arg1, %c0_i32, %c0_i32_0 : i32, i32, i32, i32
  }
  func.func @transform_4(%arg0: i32, %arg1: i32, %arg2: i32) -> (i32, i32, i32, i32) {
    %c0_i32 = arith.constant 0 : i32
    %c0_i32_0 = arith.constant 0 : i32
    %c0_i32_1 = arith.constant 0 : i32
    return %arg0, %arg1, %c0_i32, %c0_i32_0 : i32, i32, i32, i32
  }
}

</mosaic_0001>

<llo_original>
// kernel: tpu_custom_call.1
$region0: #{tpu_custom_call.1}
  #allocation0 [shape = 'u32[]', space=smem, size = 0x4, offset = 0x4, fixed_abs, tag = 'smem constant byte address 0x4 - core index']
  #allocation1 [shape = 'u32[144,128]{1,0:T(1,128)}', space=vmem, size = 0x12000, scoped, tag = 'internal scratch']
  #allocation2 [shape = 'f32[3,1]{1,0:T(4,128)}', space=vmem, size = 0x800, scoped, tag = 'scratch operand']
  #allocation3 [shape = 'f32[3,1]{1,0:T(4,128)}', space=vmem, size = 0x800, scoped, tag = 'scratch operand']
  %s0 = inlined_call_operand.hbm [shape: f32[2,4,256], index: 0, kind: input, shape index: {}]
  %s1 = inlined_call_operand.hbm [shape: f32[2,4,256], index: 1, kind: input, shape index: {}]
  %s2 = inlined_call_operand.vmem [shape: s8[2,1,256], index: 2, kind: input, shape index: {}]
  %s3 = inlined_call_operand.vmem [shape: f32[2,1,3,1], index: 3, kind: output, shape index: {0}]
  %s4 = inlined_call_operand.vmem [shape: f32[2,1,3,1], index: 4, kind: output, shape index: {1}]
  %5 = xla_tuple %s3, %s4
  %s6 = sld [smem:[#allocation0]]
  $region69: #{tpu_custom_call.1} parent=0
    _
  %s8 = ssub.s32 1, %s6
  %s9 = scalar_select 0, %s8, %s6
  $region1: #{tpu_custom_call.1} parent=0
    #allocation4 [shape = 'u8[8192]{0}', space=vmem, size = 0x2000, scoped, tag = 'input window, operand 0']
    #allocation5 [shape = 's32[2]{0}', space=sflag, size = 0x8, scoped, tag = 'scoped memory for tpu_custom_call.1']
    #allocation6 [shape = 'u8[8192]{0}', space=vmem, size = 0x2000, scoped, tag = 'input window, operand 1']
    #allocation7 [shape = 's32[2]{0}', space=sflag, size = 0x8, scoped, tag = 'scoped memory for tpu_custom_call.1']
    %10 = vsyncpa [#allocation5], 0
    %s11 = scalar_lea.sflag [#allocation5], 1
    %12 = vsyncpa %s11, 0
    %13 = vsyncpa [#allocation7], 0
    %s14 = scalar_lea.sflag [#allocation7], 1
    %15 = vsyncpa %s14, 0
    loop: start=0, step=1, limit=4
    $region2: #{tpu_custom_call.1} parent=1 // loop_pre_header
      _
    $region3: #{tpu_custom_call.1} parent=1 // loop_header
      %s17 = sphi 0, %s21
      %p18 = scmp.ge.s32.totalorder %s17, 4
      %s24 = sphi 0, %s43
      %s25 = sphi 0, %s39
      %s26 = sphi 0, %s35
      %s27 = sphi 0, %s24
      %s28 = sphi 0, %s25
      %s29 = sphi 0, %s26
      %s30 = sphi 0, %s27
      %s31 = sphi 0, %s28
      %s32 = sphi 0, %s29
      %s54 = sphi 0, %s56
      %s57 = sphi 0, %s54
      %s58 = sphi 0, %s57
      %s74 = sphi 0, %s58
      %s88 = sphi 0, %s90
      %s91 = sphi 0, %s88
      %s92 = sphi 0, %s91
      %s108 = sphi 0, %s92
      %s118 = sphi 0, %s120
      %s121 = sphi 0, %s118
      %s122 = sphi 0, %s121
      %s138 = sphi 0, %s122
      %s146 = sphi 0, %s148
      %s149 = sphi 0, %s146
      %s150 = sphi 0, %s149
      %s166 = sphi 0, %s150
      %s174 = sphi 0, %s176
      %s177 = sphi 0, %s174
      %s178 = sphi 0, %s177
      %s194 = sphi 0, %s178
    $region4: #{tpu_custom_call.1} parent=1 // loop_header_branch
      %20 = sbr.rel (%p18) target = $region8
    $region5: #{tpu_custom_call.1} parent=1 // loop_body
      %s22 = ssub.s32 %s17, 1
      %s23 = ssub.s32 %s17, 2
      %s33 = sadd.s32 1, %s26
      %p34 = scmp.ge.s32.totalorder %s33, 1
      %s35 = scalar_select %p34, 0, %s33
      %s36 = sadd.s32 1, %s25
      %s37 = scalar_select %p34, %s36, %s25
      %p38 = scmp.ge.s32.totalorder %s37, 1
      %s39 = scalar_select %p38, 0, %s37
      %s40 = sadd.s32 1, %s24
      %s41 = scalar_select %p38, %s40, %s24
      %p42 = scmp.ge.s32.totalorder %s41, 2
      %s43 = scalar_select %p42, 0, %s41
      %s44 = sadd.s32 %s25, %s26
      %p45 = scmp.lt.s32.totalorder %s44, 0
      %s46 = scalar_select %p45, %s44, 0
      %s47 = sadd.s32 %s39, %s35
      %p48 = scmp.lt.s32.totalorder %s47, 0
      %s49 = scalar_select %p48, %s47, 0
      %s50 = ssub.s32 %s24, %s43
      %s51 = ssub.s32 %s46, %s49
      %s52 = sor.u32 %s50, %s51
      %p53 = scmp.eq.s32.totalorder %s52, 0
      %s55 = sadd.s32 %s54, 1
      %s56 = scalar_select %p53, %s54, %s55
      %p59 = pneg %p53
      %p60 = scmp.eq.s32.totalorder %s17, 1
      %p61 = por %p59, %p60
      %p62 = scmp.ne.s32.totalorder %s54, %s57
      %p63 = scmp.eq.s32.totalorder %s17, 0
      %p64 = por %p62, %p63
      %p65 = scmp.ne.s32.totalorder %s54, %s57
      %p66 = scmp.eq.s32.totalorder %s22, 1
      %p67 = por %p65, %p66
      %p68 = scmp.ne.s32.totalorder %s57, %s58
      %p69 = scmp.eq.s32.totalorder %s22, 0
      %p70 = por %p68, %p69
      %p71 = scmp.ne.s32.totalorder %s57, %s58
      %p72 = scmp.eq.s32.totalorder %s23, 1
      %p73 = por %p71, %p72
      %p75 = scmp.ne.s32.totalorder %s58, %s74
      %p76 = scmp.eq.s32.totalorder %s23, 0
      %p77 = por %p75, %p76
      %s78 = sadd.s32 %s25, %s26
      %p79 = scmp.lt.s32.totalorder %s78, 0
      %s80 = scalar_select %p79, %s78, 0
      %s81 = sadd.s32 %s39, %s35
      %p82 = scmp.lt.s32.totalorder %s81, 0
      %s83 = scalar_select %p82, %s81, 0
      %s84 = ssub.s32 %s24, %s43
      %s85 = ssub.s32 %s80, %s83
      %s86 = sor.u32 %s84, %s85
      %p87 = scmp.eq.s32.totalorder %s86, 0
      %s89 = sadd.s32 %s88, 1
      %s90 = scalar_select %p87, %s88, %s89
      %p93 = pneg %p87
      %p94 = scmp.eq.s32.totalorder %s17, 1
      %p95 = por %p93, %p94
      %p96 = scmp.ne.s32.totalorder %s88, %s91
      %p97 = scmp.eq.s32.totalorder %s17, 0
      %p98 = por %p96, %p97
      %p99 = scmp.ne.s32.totalorder %s88, %s91
      %p100 = scmp.eq.s32.totalorder %s22, 1
      %p101 = por %p99, %p100
      %p102 = scmp.ne.s32.totalorder %s91, %s92
      %p103 = scmp.eq.s32.totalorder %s22, 0
      %p104 = por %p102, %p103
      %p105 = scmp.ne.s32.totalorder %s91, %s92
      %p106 = scmp.eq.s32.totalorder %s23, 1
      %p107 = por %p105, %p106
      %p109 = scmp.ne.s32.totalorder %s92, %s108
      %p110 = scmp.eq.s32.totalorder %s23, 0
      %p111 = por %p109, %p110
      %s112 = sadd.s32 %s25, %s26
      %s113 = sadd.s32 %s39, %s35
      %s114 = ssub.s32 %s24, %s43
      %s115 = ssub.s32 %s112, %s113
      %s116 = sor.u32 %s114, %s115
      %p117 = scmp.eq.s32.totalorder %s116, 0
      %s119 = sadd.s32 %s118, 1
      %s120 = scalar_select %p117, %s118, %s119
      %p123 = pneg %p117
      %p124 = scmp.eq.s32.totalorder %s17, 1
      %p125 = por %p123, %p124
      %p126 = scmp.ne.s32.totalorder %s118, %s121
      %p127 = scmp.eq.s32.totalorder %s17, 0
      %p128 = por %p126, %p127
      %p129 = scmp.ne.s32.totalorder %s118, %s121
      %p130 = scmp.eq.s32.totalorder %s22, 1
      %p131 = por %p129, %p130
      %p132 = scmp.ne.s32.totalorder %s121, %s122
      %p133 = scmp.eq.s32.totalorder %s22, 0
      %p134 = por %p132, %p133
      %p135 = scmp.ne.s32.totalorder %s121, %s122
      %p136 = scmp.eq.s32.totalorder %s23, 1
      %p137 = por %p135, %p136
      %p139 = scmp.ne.s32.totalorder %s122, %s138
      %p140 = scmp.eq.s32.totalorder %s23, 0
      %p141 = por %p139, %p140
      %s142 = ssub.s32 %s24, %s43
      %s143 = ssub.s32 %s25, %s39
      %s144 = sor.u32 %s142, %s143
      %p145 = scmp.eq.s32.totalorder %s144, 0
      %s147 = sadd.s32 %s146, 1
      %s148 = scalar_select %p145, %s146, %s147
      %p151 = pneg %p145
      %p152 = scmp.eq.s32.totalorder %s17, 1
      %p153 = por %p151, %p152
      %p154 = scmp.ne.s32.totalorder %s146, %s149
      %p155 = scmp.eq.s32.totalorder %s17, 0
      %p156 = por %p154, %p155
      %p157 = scmp.ne.s32.totalorder %s146, %s149
      %p158 = scmp.eq.s32.totalorder %s22, 1
      %p159 = por %p157, %p158
      %p160 = scmp.ne.s32.totalorder %s149, %s150
      %p161 = scmp.eq.s32.totalorder %s22, 0
      %p162 = por %p160, %p161
      %p163 = scmp.ne.s32.totalorder %s149, %s150
      %p164 = scmp.eq.s32.totalorder %s23, 1
      %p165 = por %p163, %p164
      %p167 = scmp.ne.s32.totalorder %s150, %s166
      %p168 = scmp.eq.s32.totalorder %s23, 0
      %p169 = por %p167, %p168
      %s170 = ssub.s32 %s24, %s43
      %s171 = ssub.s32 %s25, %s39
      %s172 = sor.u32 %s170, %s171
      %p173 = scmp.eq.s32.totalorder %s172, 0
      %s175 = sadd.s32 %s174, 1
      %s176 = scalar_select %p173, %s174, %s175
      %p179 = pneg %p173
      %p180 = scmp.eq.s32.totalorder %s17, 1
      %p181 = por %p179, %p180
      %p182 = scmp.ne.s32.totalorder %s174, %s177
      %p183 = scmp.eq.s32.totalorder %s17, 0
      %p184 = por %p182, %p183
      %p185 = scmp.ne.s32.totalorder %s174, %s177
      %p186 = scmp.eq.s32.totalorder %s22, 1
      %p187 = por %p185, %p186
      %p188 = scmp.ne.s32.totalorder %s177, %s178
      %p189 = scmp.eq.s32.totalorder %s22, 0
      %p190 = por %p188, %p189
      %p191 = scmp.ne.s32.totalorder %s177, %s178
      %p192 = scmp.eq.s32.totalorder %s23, 1
      %p193 = por %p191, %p192
      %p195 = scmp.ne.s32.totalorder %s178, %s194
      %p196 = scmp.eq.s32.totalorder %s23, 0
      %p197 = por %p195, %p196
      %p198 = scmp.le.s32.totalorder 1, %s17
      %p199 = scmp.lt.s32.totalorder %s17, 3
      %p200 = pnand %p198, %p199
      %p201 = pneg %p200
      // Predicated region
      $region9: #{tpu_custom_call.1} parent=5 // pred_check
        _
      $region10: #{tpu_custom_call.1} parent=5 // pred_check_branch
        %203 = sbr.rel (%p200) target = $region12
      $region11: #{tpu_custom_call.1} parent=5 // pred_region
        %s204 = ssub.s32 %s17, 1
      $region12: #{tpu_custom_call.1} parent=5 // pred_fallthru
        _
      %p205 = scmp.lt.s32.totalorder %s17, 2
      // Predicated region
      $region13: #{tpu_custom_call.1} parent=5 // pred_check
        %p206 = pneg %p205
      $region14: #{tpu_custom_call.1} parent=5 // pred_check_branch
        %208 = sbr.rel (%p206) target = $region16
      $region15: #{tpu_custom_call.1} parent=5 // pred_region
        // Predicated region
        $region17: #{tpu_custom_call.1} parent=15 // pred_check
          %p209 = pneg %p64
        $region18: #{tpu_custom_call.1} parent=15 // pred_check_branch
          %211 = sbr.rel (%p209) target = $region20
        $region19: #{tpu_custom_call.1} parent=15 // pred_region
          %s212 = sand.u32 %s54, 1
          %s213 = scalar_lea.sflag [#allocation5], %s212
          %s214 = sand.u32 %s54, 1
          %s215 = smul.addr %s214, 8
          %s216 = scalar_lea.vmem [#allocation4], %s215
          %s217 = sadd.s32 %s25, %s26
          %p218 = scmp.lt.s32.totalorder %s217, 0
          %s219 = scalar_select %p218, %s217, 0
          %s220 = smul.u32 2, %s219
          %s222 = ssub.s32 128, 128
          %223 = vsyncadd %s213, %s222
          %s224 = smul.addr %s24, 2
          %s225 = sadd.s32 %s220, %s224
          %s226 = smul.addr %s225, 64
          %s227 = scalar_lea.hbm %s0, %s226
          %s229 = sshll.u32 %s216, 4
          %s230 = int_to_ptr.vmem [resolvable:$true] %s229
          %232 = dma.hbm_to_vmem [thread:$0]  %s227, 128, %s230, %s213
        $region20: #{tpu_custom_call.1} parent=15 // pred_fallthru
          _
        // Predicated region
        $region21: #{tpu_custom_call.1} parent=15 // pred_check
          %p233 = pneg %p98
        $region22: #{tpu_custom_call.1} parent=15 // pred_check_branch
          %235 = sbr.rel (%p233) target = $region24
        $region23: #{tpu_custom_call.1} parent=15 // pred_region
          %s236 = sand.u32 %s88, 1
          %s237 = scalar_lea.sflag [#allocation7], %s236
          %s238 = sand.u32 %s88, 1
          %s239 = smul.addr %s238, 8
          %s240 = scalar_lea.vmem [#allocation6], %s239
          %s241 = sadd.s32 %s25, %s26
          %p242 = scmp.lt.s32.totalorder %s241, 0
          %s243 = scalar_select %p242, %s241, 0
          %s244 = smul.u32 2, %s243
          %s246 = ssub.s32 128, 128
          %247 = vsyncadd %s237, %s246
          %s248 = smul.addr %s24, 2
          %s249 = sadd.s32 %s244, %s248
          %s250 = smul.addr %s249, 64
          %s251 = scalar_lea.hbm %s1, %s250
          %s253 = sshll.u32 %s240, 4
          %s254 = int_to_ptr.vmem [resolvable:$true] %s253
          %256 = dma.hbm_to_vmem [thread:$0]  %s251, 128, %s254, %s237
        $region24: #{tpu_custom_call.1} parent=15 // pred_fallthru
          _
        // Predicated region
        $region25: #{tpu_custom_call.1} parent=15 // pred_check
          %p257 = pneg %p128
        $region26: #{tpu_custom_call.1} parent=15 // pred_check_branch
          %259 = sbr.rel (%p257) target = $region28
        $region27: #{tpu_custom_call.1} parent=15 // pred_region
          %s260 = sadd.s32 %s25, %s26
          %s261 = smul.u32 2, %s260
          %p262 = scmp.lt.s32.totalorder %s24, 1
          %s263 = scalar_select %p262, %s24, 1
          %p264 = scmp.lt.s32.totalorder %s261, 1
          %s265 = scalar_select %p264, %s261, 1
          %s266 = smul.addr %s263, 2
          %s267 = sadd.s32 %s265, %s266
          %s268 = scalar_lea.vmem %s2, %s267
          %s269 = sadd.s32 %s25, %s26
          %s270 = smul.u32 2, %s269
        $region28: #{tpu_custom_call.1} parent=15 // pred_fallthru
          _
      $region16: #{tpu_custom_call.1} parent=5 // pred_fallthru
        _
      %p271 = scmp.le.s32.totalorder 1, %s17
      %p272 = scmp.lt.s32.totalorder %s17, 3
      %p273 = pnand %p271, %p272
      %p274 = pneg %p273
      // Predicated region
      $region29: #{tpu_custom_call.1} parent=5 // pred_check
        _
      $region30: #{tpu_custom_call.1} parent=5 // pred_check_branch
        %276 = sbr.rel (%p273) target = $region32
      $region31: #{tpu_custom_call.1} parent=5 // pred_region
        %s277 = ssub.s32 %s17, 1
        %s278 = sand.u32 %s57, 1
        %s279 = scalar_lea.sflag [#allocation5], %s278
        %s280 = sand.u32 %s57, 1
        %s281 = smul.addr %s280, 8
        %s282 = scalar_lea.vmem [#allocation4], %s281
        // Predicated region
        $region33: #{tpu_custom_call.1} parent=31 // pred_check
          %p283 = pneg %p70
        $region34: #{tpu_custom_call.1} parent=31 // pred_check_branch
          %285 = sbr.rel (%p283) target = $region36
        $region35: #{tpu_custom_call.1} parent=31 // pred_region
          %286 = dma.done %s279, 128
        $region36: #{tpu_custom_call.1} parent=31 // pred_fallthru
          _
        %s287 = sand.u32 %s91, 1
        %s288 = scalar_lea.sflag [#allocation7], %s287
        %s289 = sand.u32 %s91, 1
        %s290 = smul.addr %s289, 8
        %s291 = scalar_lea.vmem [#allocation6], %s290
        // Predicated region
        $region37: #{tpu_custom_call.1} parent=31 // pred_check
          %p292 = pneg %p104
        $region38: #{tpu_custom_call.1} parent=31 // pred_check_branch
          %294 = sbr.rel (%p292) target = $region40
        $region39: #{tpu_custom_call.1} parent=31 // pred_region
          %295 = dma.done %s288, 128
        $region40: #{tpu_custom_call.1} parent=31 // pred_fallthru
          _
        %s296 = sand.u32 %s57, 1
        %s297 = scalar_lea.sflag [#allocation5], %s296
        %s298 = sand.u32 %s57, 1
        %s299 = smul.addr %s298, 8
        %s300 = scalar_lea.vmem [#allocation4], %s299
        %p301 = pneg %p70
        %p302 = pneg %p67
        %s303 = sand.u32 %s91, 1
        %s304 = scalar_lea.sflag [#allocation7], %s303
        %s305 = sand.u32 %s91, 1
        %s306 = smul.addr %s305, 8
        %s307 = scalar_lea.vmem [#allocation6], %s306
        %p308 = pneg %p104
        %p309 = pneg %p101
        %s310 = sadd.s32 %s28, %s29
        %s311 = smul.u32 2, %s310
        %p312 = scmp.lt.s32.totalorder %s27, 1
        %s313 = scalar_select %p312, %s27, 1
        %p314 = scmp.lt.s32.totalorder %s311, 1
        %s315 = scalar_select %p314, %s311, 1
        %s316 = smul.addr %s313, 2
        %s317 = sadd.s32 %s315, %s316
        %s318 = scalar_lea.vmem %s2, %s317
        %p319 = pneg %p134
        %p320 = pneg %p131
        %p321 = pneg %p162
        %p322 = pneg %p159
        %p323 = scmp.lt.s32.totalorder %s27, 1
        %s324 = scalar_select %p323, %s27, 1
        %p325 = scmp.lt.s32.totalorder %s28, 0
        %s326 = scalar_select %p325, %s28, 0
        %s327 = sadd.s32 %s326, %s324
        %s328 = smul.addr %s327, 4
        %s329 = scalar_lea.vmem %s3, %s328
        %p330 = pneg %p190
        %p331 = pneg %p187
        %p332 = scmp.lt.s32.totalorder %s27, 1
        %s333 = scalar_select %p332, %s27, 1
        %p334 = scmp.lt.s32.totalorder %s28, 0
        %s335 = scalar_select %p334, %s28, 0
        %s336 = sadd.s32 %s335, %s333
        %s337 = smul.addr %s336, 4
        %s338 = scalar_lea.vmem %s4, %s337
        %s339 = sadd.s32 %s28, %s29
        %p340 = scmp.lt.s32.totalorder %s339, 0
        %s341 = scalar_select %p340, %s339, 0
        %s342 = smul.u32 2, %s341
        %s343 = sadd.s32 %s28, %s29
        %p344 = scmp.lt.s32.totalorder %s343, 0
        %s345 = scalar_select %p344, %s343, 0
        %s346 = smul.u32 2, %s345
        %s347 = sadd.s32 %s28, %s29
        %s348 = smul.u32 2, %s347
        %p349 = scmp.lt.s32.totalorder %s27, 1
        %s350 = scalar_select %p349, %s27, 1
        %p351 = scmp.lt.s32.totalorder %s348, 1
        %s352 = scalar_select %p351, %s348, 1
        %s353 = smul.addr %s350, 2
        %s354 = sadd.s32 %s352, %s353
        %s355 = scalar_lea.vmem %s2, %s354
        %s356 = sadd.s32 %s28, %s29
        %s357 = smul.u32 2, %s356
        %p358 = scmp.lt.s32.totalorder %s27, 1
        %s359 = scalar_select %p358, %s27, 1
        %p360 = scmp.lt.s32.totalorder %s28, 0
        %s361 = scalar_select %p360, %s28, 0
        %s362 = sadd.s32 %s361, %s359
        %s363 = smul.addr %s362, 4
        %s364 = scalar_lea.vmem %s3, %s363
        %p365 = scmp.lt.s32.totalorder %s27, 1
        %s366 = scalar_select %p365, %s27, 1
        %p367 = scmp.lt.s32.totalorder %s28, 0
        %s368 = scalar_select %p367, %s28, 0
        %s369 = sadd.s32 %s368, %s366
        %s370 = smul.addr %s369, 4
        %s371 = scalar_lea.vmem %s4, %s370
        %p372 = scmp.eq.s32.totalorder %s29, 0
        // Predicated region
        $region41: #{tpu_custom_call.1} parent=31 // pred_check
          %p373 = pneg %p372
        $region42: #{tpu_custom_call.1} parent=31 // pred_check_branch
          %375 = sbr.rel (%p373) target = $region44
        $region43: #{tpu_custom_call.1} parent=31 // pred_region
          %vm376 = vcmask 2048
          %377 = vst.msk [vmem:[#allocation2] sm:$0x7] %vm376, 0.0
          %378 = vst.msk [vmem:[#allocation3] sm:$0x7] %vm376, 0.0
        $region44: #{tpu_custom_call.1} parent=31 // pred_fallthru
          _
        %v379 = vld [vmem:[%s282] sm:$0xff]
        %v380 = vld [vmem:[%s291] sm:$0xff]
        %v381 = vsub.f32 %v379, %v380
        %v382 = vand.u32 2147483647, %v381
        %v384 = vcombine.high %v382, %v382
        %vm386 = vcmask 1043456
        %v387 = vsel %vm386, %v382, 0.0
        %v388 = vrot.slane %v387, 4
        %v389 = vadd.f32 %v387, %v388
        %v390 = vrot.slane %v389, 2
        %v391 = vadd.f32 %v389, %v390
        %v392 = vrot.slane %v391, 1
        %v393 = vadd.f32 %v391, %v392
        %v394 = vsel %vm386, %v384, 0.0
        %v395 = vrot.slane %v394, 4
        %v396 = vadd.f32 %v394, %v395
        %v397 = vrot.slane %v396, 2
        %v398 = vadd.f32 %v396, %v397
        %v399 = vrot.slane %v398, 1
        %v400 = vadd.f32 %v398, %v399
        %v401 = vld [vmem:[%s355] sm:$0x3]
        %v402 = vunpack.c.0.s8 %v401
        %v403 = vlaneseq
        %v404 = vshrl.u32 %v403, 7
        %v405 = vlaneseq
        %v406 = vshrl.u32 %v405, 7
        %v407 = vsub.s32 0, %v406
        %v408 = vrot.slane %v402, %v407
        %v409 = vlaneseq
        %v410 = vshrl.u32 %v409, 7
        %v411 = vsub.s32 4, %v410
        %v412 = vrot.slane %v402, %v411
        %v413 = vlaneseq
        %v414 = vshrl.u32 %v413, 7
        %v415 = vsub.s32 0, %v414
        %v416 = vrot.slane %v408, %v415
        %v417 = vlaneseq
        %v418 = vshrl.u32 %v417, 7
        %v419 = vsub.s32 0, %v418
        %v420 = vrot.slane %v412, %v419
        %vm421 = vcmp.eq.s32.totalorder %v416, %v404
        %vm422 = vcmp.eq.s32.totalorder %v420, %v404
        %v423 = vld [vmem:[#allocation2] sm:$0x7]
        %v424 = vsel %vm421, %v393, 0.0
        %v425 = vsel %vm422, %v400, 0.0
        %vm426 = vcmask 1042432
        %v427 = vsel %vm426, %v424, 0.0
        %v428 = vsel %vm426, %v425, 0.0
        %v429 = vadd.f32 %v427, %v428
        %430 = vadd.xlane.f32.xlu0 %v429
        %v431 = vpop.xlane.xlu0 %430
        %v432 = vadd.f32 %v423, %v431
        %vm433 = vcmask 2048
        %434 = vst.msk [vmem:[#allocation2] sm:$0x7] %vm433, %v432
        %v435 = vld [vmem:[#allocation3] sm:$0x7]
        %v436 = vsel %vm421, 1.0, 0.0
        %v437 = vsel %vm422, 1.0, 0.0
        %v438 = vsel %vm426, %v436, 0.0
        %v439 = vsel %vm426, %v437, 0.0
        %v440 = vadd.f32 %v438, %v439
        %441 = vadd.xlane.f32.xlu0 %v440
        %v442 = vpop.xlane.xlu0 %441
        %v443 = vadd.f32 %v435, %v442
        %444 = vst.msk [vmem:[#allocation3] sm:$0x7] %vm433, %v443
        // Predicated region
        $region45: #{tpu_custom_call.1} parent=31 // pred_check
          %p445 = pneg %p372
        $region46: #{tpu_custom_call.1} parent=31 // pred_check_branch
          %447 = sbr.rel (%p445) target = $region48
        $region47: #{tpu_custom_call.1} parent=31 // pred_region
          %v448 = vld [vmem:[#allocation2] sm:$0x7]
          %449 = vst.msk [vmem:[%s364] sm:$0x7] %vm433, %v448
          %v450 = vld [vmem:[#allocation3] sm:$0x7]
          %451 = vst.msk [vmem:[%s371] sm:$0x7] %vm433, %v450
        $region48: #{tpu_custom_call.1} parent=31 // pred_fallthru
          _
        %p452 = scmp.lt.s32.totalorder %s27, 1
        %s453 = scalar_select %p452, %s27, 1
        %p454 = scmp.lt.s32.totalorder %s28, 0
        %s455 = scalar_select %p454, %s28, 0
        %s456 = sadd.s32 %s455, %s453
        %s457 = smul.addr %s456, 4
        %s458 = scalar_lea.vmem %s3, %s457
        %p459 = scmp.lt.s32.totalorder %s27, 1
        %s460 = scalar_select %p459, %s27, 1
        %p461 = scmp.lt.s32.totalorder %s28, 0
        %s462 = scalar_select %p461, %s28, 0
        %s463 = sadd.s32 %s462, %s460
        %s464 = smul.addr %s463, 4
        %s465 = scalar_lea.vmem %s4, %s464
        // Predicated region
        $region49: #{tpu_custom_call.1} parent=31 // pred_check
          %p466 = pneg %p159
        $region50: #{tpu_custom_call.1} parent=31 // pred_check_branch
          %468 = sbr.rel (%p466) target = $region52
        $region51: #{tpu_custom_call.1} parent=31 // pred_region
          _
        $region52: #{tpu_custom_call.1} parent=31 // pred_fallthru
          _
        // Predicated region
        $region53: #{tpu_custom_call.1} parent=31 // pred_check
          %p469 = pneg %p187
        $region54: #{tpu_custom_call.1} parent=31 // pred_check_branch
          %471 = sbr.rel (%p469) target = $region56
        $region55: #{tpu_custom_call.1} parent=31 // pred_region
          _
        $region56: #{tpu_custom_call.1} parent=31 // pred_fallthru
          _
      $region32: #{tpu_custom_call.1} parent=5 // pred_fallthru
        _
      %p472 = scmp.le.s32.totalorder 2, %s17
      // Predicated region
      $region57: #{tpu_custom_call.1} parent=5 // pred_check
        %p473 = pneg %p472
      $region58: #{tpu_custom_call.1} parent=5 // pred_check_branch
        %475 = sbr.rel (%p473) target = $region60
      $region59: #{tpu_custom_call.1} parent=5 // pred_region
        %s476 = ssub.s32 %s17, 2
        // Predicated region
        $region61: #{tpu_custom_call.1} parent=59 // pred_check
          %p477 = pneg %p165
        $region62: #{tpu_custom_call.1} parent=59 // pred_check_branch
          %479 = sbr.rel (%p477) target = $region64
        $region63: #{tpu_custom_call.1} parent=59 // pred_region
          %p480 = scmp.lt.s32.totalorder %s30, 1
          %s481 = scalar_select %p480, %s30, 1
          %p482 = scmp.lt.s32.totalorder %s31, 0
          %s483 = scalar_select %p482, %s31, 0
          %s484 = sadd.s32 %s483, %s481
          %s485 = smul.addr %s484, 4
          %s486 = scalar_lea.vmem %s3, %s485
        $region64: #{tpu_custom_call.1} parent=59 // pred_fallthru
          _
        // Predicated region
        $region65: #{tpu_custom_call.1} parent=59 // pred_check
          %p487 = pneg %p193
        $region66: #{tpu_custom_call.1} parent=59 // pred_check_branch
          %489 = sbr.rel (%p487) target = $region68
        $region67: #{tpu_custom_call.1} parent=59 // pred_region
          %p490 = scmp.lt.s32.totalorder %s30, 1
          %s491 = scalar_select %p490, %s30, 1
          %p492 = scmp.lt.s32.totalorder %s31, 0
          %s493 = scalar_select %p492, %s31, 0
          %s494 = sadd.s32 %s493, %s491
          %s495 = smul.addr %s494, 4
          %s496 = scalar_lea.vmem %s4, %s495
        $region68: #{tpu_custom_call.1} parent=59 // pred_fallthru
          _
      $region60: #{tpu_custom_call.1} parent=5 // pred_fallthru
        _
    $region6: #{tpu_custom_call.1} parent=1 // loop_footer
      %s21 = sadd.s32 1, %s17
    $region7: #{tpu_custom_call.1} parent=1 // loop_footer_branch
      %16 = sbr.rel target = $region3
    $region8: #{tpu_custom_call.1} parent=1 // loop_exit
      _
    %497 = vsyncpa [#allocation5], 1
    %s498 = scalar_lea.sflag [#allocation5], 1
    %499 = vsyncpa %s498, 1
    %500 = vsyncpa [#allocation7], 1
    %s501 = scalar_lea.sflag [#allocation7], 1
    %502 = vsyncpa %s501, 1

</llo_original>
